<compile_context>
chip_gen: v7x
topology: tpu7x:2x2x1
jax: 0.10.0
libtpu: 0.0.40
codegen_flags: <defaults>
</compile_context>

<pallas_src>
import functools

import jax
import jax.numpy as jnp
from jax.experimental import pallas as pl
from jax.experimental.pallas import tpu as pltpu


# Row/aggregation tile for large graphs.  Multiple of 256 so the 2x256x256 MXU on
# v6e/v7x is filled; also fine (4 passes of 128) on v5e's 4x128x128 MXU.
_TILE = 512


def _round_up(v, m):
    return ((v + m - 1) // m) * m


def _pad_nodes(n, tile=_TILE):
    """Pad node count so the tile size divides it exactly."""
    if n <= tile:
        return max(_round_up(n, 128), 128)
    return _round_up(n, tile)


def _vmem_limit_bytes():
    """Generation-aware scoped-VMEM budget: ~3/4 of physical capacity.

    ~96 MiB on v5e/v6e (128 MiB physical), ~48 MiB on v7x (64 MiB physical),
    leaving headroom for double-buffered DMA.
    """
    try:
        cap = pltpu.get_tpu_info().vmem_capacity_bytes
    except Exception:
        cap = 64 << 20  # conservative fallback = v7x physical VMEM
    return int(cap) * 3 // 4


# ---------------------------------------------------------------------------
# One tiled GCN layer: out = act(A_hat @ (X @ W) + b)
# ---------------------------------------------------------------------------
def _gcn_layer_kernel(a_ref, x_ref, w_ref, b_ref, o_ref, acc_ref, *, apply_relu):
    """Grid = (row tiles i, aggregation tiles k).

    a_ref : (tm, tk)    bf16  A_hat tile at (i, k)
    x_ref : (tk, F_p)   bf16  input-feature rows for aggregation tile k
    w_ref : (F_p, C_p)  bf16  layer weight (resident full block)
    b_ref : (1, C_p)    f32   layer bias   (resident full block)
    o_ref : (tm, C_p)         output rows for tile i (written at last k)
    acc_ref:(tm, C_p)   f32   VMEM accumulator scratch
    """
    k = pl.program_id(1)

    @pl.when(k == 0)
    def _():
        acc_ref[...] = jnp.zeros_like(acc_ref)

    # Feature transform for this k-tile (cheap: tk x F_p x C_p), then aggregation
    # (tm x tk x C_p) on the MXU with f32 accumulation.
    xw = jnp.dot(x_ref[...], w_ref[...], preferred_element_type=jnp.float32)
    acc_ref[...] += jnp.dot(a_ref[...], xw.astype(jnp.bfloat16),
                            preferred_element_type=jnp.float32)

    @pl.when(k == pl.num_programs(1) - 1)
    def _():
        r = acc_ref[...] + b_ref[...]
        if apply_relu:
            r = jnp.maximum(r, 0.0)
        # Cast fused into the epilogue: only the (bf16) output copy leaves VMEM.
        o_ref[...] = r.astype(o_ref.dtype)


def gcn_layer(a_pad, x_pad, w_pad, b_pad, *, apply_relu, out_dtype):
    n_pad = a_pad.shape[0]
    f_pad = x_pad.shape[1]
    c_pad = w_pad.shape[1]

    tm = tk = min(_TILE, n_pad)          # n_pad is a multiple of the tile by construction
    nr, nk = n_pad // tm, n_pad // tk

    # Advisory cost for XLA's scheduler around the custom call.
    flops = 2 * nr * n_pad * f_pad * c_pad + 2 * n_pad * n_pad * c_pad
    bytes_accessed = (a_pad.size * a_pad.dtype.itemsize
                      + nr * x_pad.size * x_pad.dtype.itemsize
                      + w_pad.size * w_pad.dtype.itemsize
                      + b_pad.size * b_pad.dtype.itemsize
                      + n_pad * c_pad * jnp.dtype(out_dtype).itemsize)

    kernel = functools.partial(_gcn_layer_kernel, apply_relu=apply_relu)
    return pl.pallas_call(
        kernel,
        out_shape=jax.ShapeDtypeStruct((n_pad, c_pad), out_dtype),
        grid_spec=pltpu.PrefetchScalarGridSpec(
            num_scalar_prefetch=0,
            grid=(nr, nk),
            in_specs=[
                pl.BlockSpec((tm, tk), lambda i, k: (i, k)),        # A_hat tile
                pl.BlockSpec((tk, f_pad), lambda i, k: (k, 0)),     # X / H rows
                pl.BlockSpec((f_pad, c_pad), lambda i, k: (0, 0)),  # W (resident)
                pl.BlockSpec((1, c_pad), lambda i, k: (0, 0)),      # b (resident)
            ],
            out_specs=pl.BlockSpec((tm, c_pad), lambda i, k: (i, 0)),
            scratch_shapes=[pltpu.VMEM((tm, c_pad), jnp.float32)],
        ),
        compiler_params=pltpu.CompilerParams(
            dimension_semantics=("parallel", "arbitrary"),
            vmem_limit_bytes=_vmem_limit_bytes(),
        ),
        cost_estimate=pl.CostEstimate(flops=flops, transcendentals=0,
                                      bytes_accessed=bytes_accessed),
    )(a_pad, x_pad, w_pad, b_pad)


# ---------------------------------------------------------------------------
# Graph preprocessing (computed ONCE per graph, outside the forward hot path)
# ---------------------------------------------------------------------------
def build_normalized_adjacency(edge_index, num_nodes):
    """Dense GCN normalization: A_hat = D^{-1/2} (A + I_remaining) D^{-1/2}.

    Matches PyG gcn_norm for undirected/symmetric edge_index: duplicate edges are
    summed, self-loops only added where missing.
    """
    src = edge_index[0]
    dst = edge_index[1]
    adj = jnp.zeros((num_nodes, num_nodes), dtype=jnp.float32)
    adj = adj.at[dst, src].add(1.0)  # message src -> dst; duplicates summed
    diag = jnp.diagonal(adj)
    adj = adj + jnp.diag(jnp.where(diag == 0.0, 1.0, 0.0))  # add_remaining_self_loops
    deg = jnp.sum(adj, axis=1)
    d_inv_sqrt = jnp.where(deg > 0, 1.0 / jnp.sqrt(deg), 0.0)
    return d_inv_sqrt[:, None] * adj * d_inv_sqrt[None, :]


def prepare_padded_inputs(a_hat, x, params):
    """Pad to tile-aligned MXU shapes; matmul operands cast to bf16."""
    n, fin = x.shape
    hid = params["w1"].shape[1]
    out = params["w2"].shape[1]
    n_p = _pad_nodes(n)
    f_p = max(_round_up(fin, 128), 128)
    h_p = max(_round_up(hid, 128), 128)
    o_p = max(_round_up(out, 128), 128)

    def pad2(m, r, c):
        return jnp.pad(m, ((0, r - m.shape[0]), (0, c - m.shape[1])))

    a_pad = pad2(a_hat, n_p, n_p).astype(jnp.bfloat16)
    x_pad = pad2(x, n_p, f_p).astype(jnp.bfloat16)
    w1_pad = pad2(params["w1"], f_p, h_p).astype(jnp.bfloat16)
    w2_pad = pad2(params["w2"], h_p, o_p).astype(jnp.bfloat16)
    b1_pad = jnp.pad(params["b1"], (0, h_p - hid)).reshape(1, h_p).astype(jnp.float32)
    b2_pad = jnp.pad(params["b2"], (0, o_p - out)).reshape(1, o_p).astype(jnp.float32)
    return a_pad, x_pad, w1_pad, b1_pad, w2_pad, b2_pad


@functools.partial(jax.jit, static_argnames=("num_nodes", "output_dim"))
def traditional_gcn_forward(a_pad, x_pad, w1_pad, b1_pad, w2_pad, b2_pad,
                            *, num_nodes, output_dim):
    """Equivalent of traditional_GCN.forward (inference), on pre-padded inputs."""
    # conv1 + ReLU (h kept bf16 so only the half-width copy feeds layer 2)
    h_pad = gcn_layer(a_pad, x_pad, w1_pad, b1_pad,
                      apply_relu=True, out_dtype=jnp.bfloat16)
    # TODO(synk): F.dropout(p=0.5, training=self.training) — identity in eval mode.
    # conv2
    out_pad = gcn_layer(a_pad, h_pad, w2_pad, b2_pad,
                        apply_relu=False, out_dtype=jnp.float32)
    return out_pad[:num_nodes, :output_dim]


def init_params(key, input_dim, hidden_dim, output_dim):
    k1, k2 = jax.random.split(key)

    def glorot(k, fan_in, fan_out):  # GCNConv: glorot weights, zero bias
        lim = jnp.sqrt(6.0 / (fan_in + fan_out))
        return jax.random.uniform(k, (fan_in, fan_out), jnp.float32, -lim, lim)

    return {
        "w1": glorot(k1, input_dim, hidden_dim),
        "b1": jnp.zeros((hidden_dim,), jnp.float32),
        "w2": glorot(k2, hidden_dim, output_dim),
        "b2": jnp.zeros((output_dim,), jnp.float32),
    }


def _reference_forward(a_hat, x, params):
    """Pure-XLA f32 reference for numeric sanity checking."""
    h = jnp.maximum(a_hat @ (x @ params["w1"]) + params["b1"], 0.0)
    return a_hat @ (h @ params["w2"]) + params["b2"]


if __name__ == "__main__":
    key = jax.random.PRNGKey(0)
    kx, kp = jax.random.split(key)

    # Small synthetic graph: 16 nodes, undirected ring, feature dim 38
    # (matches the module's embed_dim=38 hint), hidden=32, output=16.
    num_nodes = 16
    input_dim, hidden_dim, output_dim = 38, 32, 16

    x = jax.random.normal(kx, (num_nodes, input_dim), jnp.float32)
    nodes = jnp.arange(num_nodes)
    nxt = (nodes + 1) % num_nodes
    edge_index = jnp.stack(
        [jnp.concatenate([nodes, nxt]), jnp.concatenate([nxt, nodes])], axis=0
    ).astype(jnp.int32)

    params = init_params(kp, input_dim, hidden_dim, output_dim)

    # A_hat depends only on edge_index: build + pad ONCE, reuse across calls.
    a_hat = build_normalized_adjacency(edge_index, num_nodes)
    padded = prepare_padded_inputs(a_hat, x, params)

    out = traditional_gcn_forward(*padded, num_nodes=num_nodes,
                                  output_dim=output_dim)
    jax.block_until_ready(out)

    assert out.shape == (num_nodes, output_dim)
    assert bool(jnp.all(jnp.isfinite(out)))
    ref = _reference_forward(a_hat, x, params)
    # bf16 MXU operands with f32 accumulation: loose tolerance vs f32 reference.
    assert bool(jnp.allclose(out, ref, rtol=5e-2, atol=5e-2)), "mismatch vs reference"

    print("KERNEL_OK")
</pallas_src>

<mosaic_0001>
module attributes {stable_mosaic.version = 11 : i64} {
  func.func @_gcn_layer_kernel(%arg0: i32, %arg1: i32, %arg2: memref<128x128xbf16, #tpu.memory_space<vmem>>, %arg3: memref<128x128xbf16, #tpu.memory_space<vmem>>, %arg4: memref<128x128xbf16, #tpu.memory_space<vmem>>, %arg5: memref<1x128xf32, #tpu.memory_space<vmem>>, %arg6: memref<128x128xbf16, #tpu.memory_space<vmem>>, %arg7: memref<128x128xf32, #tpu.memory_space<vmem>>) attributes {dimension_semantics = [#tpu.dimension_semantics<parallel>, #tpu.dimension_semantics<arbitrary>], iteration_bounds = array<i64: 1, 1>, scalar_prefetch = 0 : i64, scratch_operands = 1 : i64, tpu.core_type = #tpu.core_type<tc>, window_params = [{transform_indices = @transform_0, window_bounds = array<i64: 128, 128>}, {transform_indices = @transform_1, window_bounds = array<i64: 128, 128>}, {pipeline_mode = #tpu.pipeline_mode<synchronous>, transform_indices = @transform_2, window_bounds = array<i64: 128, 128>}, {pipeline_mode = #tpu.pipeline_mode<synchronous>, transform_indices = @transform_3, window_bounds = array<i64: 1, 128>}, {transform_indices = @transform_4, window_bounds = array<i64: 128, 128>}]} {
    %c0_i32 = arith.constant 0 : i32
    %0 = arith.cmpi eq, %arg1, %c0_i32 : i32
    %1 = arith.extui %0 : i1 to i32
    %c0_i32_0 = arith.constant 0 : i32
    %2 = arith.cmpi ne, %1, %c0_i32_0 : i32
    scf.if %2 {
      %cst_13 = arith.constant 0.000000e+00 : f32
      %15 = vector.broadcast %cst_13 : f32 to vector<128x128xf32>
      %c0_14 = arith.constant 0 : index
      %c0_15 = arith.constant 0 : index
      %16 = vector.load %arg7[%c0_14, %c0_15] : memref<128x128xf32, #tpu.memory_space<vmem>>, vector<128x128xf32>
      tpu.vector_store %arg7[%c0_14, %c0_15], %15 {strides = array<i32>} : memref<128x128xf32, #tpu.memory_space<vmem>>, vector<128x128xf32>,
    } else {
    }
    %c0 = arith.constant 0 : index
    %c0_1 = arith.constant 0 : index
    %3 = vector.load %arg3[%c0, %c0_1] : memref<128x128xbf16, #tpu.memory_space<vmem>>, vector<128x128xbf16>
    %c0_2 = arith.constant 0 : index
    %c0_3 = arith.constant 0 : index
    %4 = vector.load %arg4[%c0_2, %c0_3] : memref<128x128xbf16, #tpu.memory_space<vmem>>, vector<128x128xbf16>
    %cst = arith.constant dense<0.000000e+00> : vector<128x128xf32>
    %5 = tpu.matmul %3, %4, %cst {dimension_numbers = #tpu.dot_dimension_numbers<[1], [0], [0], [1], [0, 0, 1, 1], [], []>} : vector<128x128xbf16>, vector<128x128xbf16>, vector<128x128xf32> -> vector<128x128xf32>
    %c0_4 = arith.constant 0 : index
    %c0_5 = arith.constant 0 : index
    %6 = vector.load %arg7[%c0_4, %c0_5] : memref<128x128xf32, #tpu.memory_space<vmem>>, vector<128x128xf32>
    %c0_6 = arith.constant 0 : index
    %c0_7 = arith.constant 0 : index
    %7 = vector.load %arg2[%c0_6, %c0_7] : memref<128x128xbf16, #tpu.memory_space<vmem>>, vector<128x128xbf16>
    %8 = arith.truncf %5 : vector<128x128xf32> to vector<128x128xbf16>
    %cst_8 = arith.constant dense<0.000000e+00> : vector<128x128xf32>
    %9 = tpu.matmul %7, %8, %cst_8 {dimension_numbers = #tpu.dot_dimension_numbers<[1], [0], [0], [1], [0, 0, 1, 1], [], []>} : vector<128x128xbf16>, vector<128x128xbf16>, vector<128x128xf32> -> vector<128x128xf32>
    %10 = arith.addf %6, %9 : vector<128x128xf32>
    %c0_9 = arith.constant 0 : index
    %c0_10 = arith.constant 0 : index
    %11 = vector.load %arg7[%c0_9, %c0_10] : memref<128x128xf32, #tpu.memory_space<vmem>>, vector<128x128xf32>
    tpu.vector_store %arg7[%c0_9, %c0_10], %10 {strides = array<i32>} : memref<128x128xf32, #tpu.memory_space<vmem>>, vector<128x128xf32>,
    %c0_i32_11 = arith.constant 0 : i32
    %12 = arith.cmpi eq, %arg1, %c0_i32_11 : i32
    %13 = arith.extui %12 : i1 to i32
    %c0_i32_12 = arith.constant 0 : i32
    %14 = arith.cmpi ne, %13, %c0_i32_12 : i32
    scf.if %14 {
      %c0_13 = arith.constant 0 : index
      %c0_14 = arith.constant 0 : index
      %15 = vector.load %arg7[%c0_13, %c0_14] : memref<128x128xf32, #tpu.memory_space<vmem>>, vector<128x128xf32>
      %c0_15 = arith.constant 0 : index
      %c0_16 = arith.constant 0 : index
      %16 = vector.load %arg5[%c0_15, %c0_16] : memref<1x128xf32, #tpu.memory_space<vmem>>, vector<1x128xf32>
      %17 = vector.broadcast %16 : vector<1x128xf32> to vector<128x128xf32>
      %18 = arith.addf %15, %17 : vector<128x128xf32>
      %cst_17 = arith.constant 0.000000e+00 : f32
      %19 = vector.broadcast %cst_17 : f32 to vector<128x128xf32>
      %20 = arith.maximumf %18, %19 : vector<128x128xf32>
      %21 = arith.truncf %20 : vector<128x128xf32> to vector<128x128xbf16>
      %c0_18 = arith.constant 0 : index
      %c0_19 = arith.constant 0 : index
      %22 = vector.load %arg6[%c0_18, %c0_19] : memref<128x128xbf16, #tpu.memory_space<vmem>>, vector<128x128xbf16>
      tpu.vector_store %arg6[%c0_18, %c0_19], %21 {strides = array<i32>} : memref<128x128xbf16, #tpu.memory_space<vmem>>, vector<128x128xbf16>,
    } else {
    }
    return
  }
  func.func @transform_0(%arg0: i32, %arg1: i32) -> (i32, i32) {
    %c0_i32 = arith.constant 0 : i32
    return %arg0, %arg1 : i32, i32
  }
  func.func @transform_1(%arg0: i32, %arg1: i32) -> (i32, i32) {
    %c0_i32 = arith.constant 0 : i32
    %c0_i32_0 = arith.constant 0 : i32
    return %arg1, %c0_i32 : i32, i32
  }
  func.func @transform_2(%arg0: i32, %arg1: i32) -> (i32, i32) {
    %c0_i32 = arith.constant 0 : i32
    %c0_i32_0 = arith.constant 0 : i32
    %c0_i32_1 = arith.constant 0 : i32
    return %c0_i32, %c0_i32_0 : i32, i32
  }
  func.func @transform_3(%arg0: i32, %arg1: i32) -> (i32, i32) {
    %c0_i32 = arith.constant 0 : i32
    %c0_i32_0 = arith.constant 0 : i32
    %c0_i32_1 = arith.constant 0 : i32
    return %c0_i32, %c0_i32_0 : i32, i32
  }
  func.func @transform_4(%arg0: i32, %arg1: i32) -> (i32, i32) {
    %c0_i32 = arith.constant 0 : i32
    %c0_i32_0 = arith.constant 0 : i32
    return %arg0, %c0_i32 : i32, i32
  }
}

module attributes {stable_mosaic.version = 11 : i64} {
  func.func @_gcn_layer_kernel(%arg0: i32, %arg1: i32, %arg2: memref<128x128xbf16, #tpu.memory_space<vmem>>, %arg3: memref<128x128xbf16, #tpu.memory_space<vmem>>, %arg4: memref<128x128xbf16, #tpu.memory_space<vmem>>, %arg5: memref<1x128xf32, #tpu.memory_space<vmem>>, %arg6: memref<128x128xf32, #tpu.memory_space<vmem>>, %arg7: memref<128x128xf32, #tpu.memory_space<vmem>>) attributes {dimension_semantics = [#tpu.dimension_semantics<parallel>, #tpu.dimension_semantics<arbitrary>], iteration_bounds = array<i64: 1, 1>, scalar_prefetch = 0 : i64, scratch_operands = 1 : i64, tpu.core_type = #tpu.core_type<tc>, window_params = [{transform_indices = @transform_0, window_bounds = array<i64: 128, 128>}, {transform_indices = @transform_1, window_bounds = array<i64: 128, 128>}, {pipeline_mode = #tpu.pipeline_mode<synchronous>, transform_indices = @transform_2, window_bounds = array<i64: 128, 128>}, {pipeline_mode = #tpu.pipeline_mode<synchronous>, transform_indices = @transform_3, window_bounds = array<i64: 1, 128>}, {transform_indices = @transform_4, window_bounds = array<i64: 128, 128>}]} {
    %c0_i32 = arith.constant 0 : i32
    %0 = arith.cmpi eq, %arg1, %c0_i32 : i32
    %1 = arith.extui %0 : i1 to i32
    %c0_i32_0 = arith.constant 0 : i32
    %2 = arith.cmpi ne, %1, %c0_i32_0 : i32
    scf.if %2 {
      %cst_13 = arith.constant 0.000000e+00 : f32
      %15 = vector.broadcast %cst_13 : f32 to vector<128x128xf32>
      %c0_14 = arith.constant 0 : index
      %c0_15 = arith.constant 0 : index
      %16 = vector.load %arg7[%c0_14, %c0_15] : memref<128x128xf32, #tpu.memory_space<vmem>>, vector<128x128xf32>
      tpu.vector_store %arg7[%c0_14, %c0_15], %15 {strides = array<i32>} : memref<128x128xf32, #tpu.memory_space<vmem>>, vector<128x128xf32>,
    } else {
    }
    %c0 = arith.constant 0 : index
    %c0_1 = arith.constant 0 : index
    %3 = vector.load %arg3[%c0, %c0_1] : memref<128x128xbf16, #tpu.memory_space<vmem>>, vector<128x128xbf16>
    %c0_2 = arith.constant 0 : index
    %c0_3 = arith.constant 0 : index
    %4 = vector.load %arg4[%c0_2, %c0_3] : memref<128x128xbf16, #tpu.memory_space<vmem>>, vector<128x128xbf16>
    %cst = arith.constant dense<0.000000e+00> : vector<128x128xf32>
    %5 = tpu.matmul %3, %4, %cst {dimension_numbers = #tpu.dot_dimension_numbers<[1], [0], [0], [1], [0, 0, 1, 1], [], []>} : vector<128x128xbf16>, vector<128x128xbf16>, vector<128x128xf32> -> vector<128x128xf32>
    %c0_4 = arith.constant 0 : index
    %c0_5 = arith.constant 0 : index
    %6 = vector.load %arg7[%c0_4, %c0_5] : memref<128x128xf32, #tpu.memory_space<vmem>>, vector<128x128xf32>
    %c0_6 = arith.constant 0 : index
    %c0_7 = arith.constant 0 : index
    %7 = vector.load %arg2[%c0_6, %c0_7] : memref<128x128xbf16, #tpu.memory_space<vmem>>, vector<128x128xbf16>
    %8 = arith.truncf %5 : vector<128x128xf32> to vector<128x128xbf16>
    %cst_8 = arith.constant dense<0.000000e+00> : vector<128x128xf32>
    %9 = tpu.matmul %7, %8, %cst_8 {dimension_numbers = #tpu.dot_dimension_numbers<[1], [0], [0], [1], [0, 0, 1, 1], [], []>} : vector<128x128xbf16>, vector<128x128xbf16>, vector<128x128xf32> -> vector<128x128xf32>
    %10 = arith.addf %6, %9 : vector<128x128xf32>
    %c0_9 = arith.constant 0 : index
    %c0_10 = arith.constant 0 : index
    %11 = vector.load %arg7[%c0_9, %c0_10] : memref<128x128xf32, #tpu.memory_space<vmem>>, vector<128x128xf32>
    tpu.vector_store %arg7[%c0_9, %c0_10], %10 {strides = array<i32>} : memref<128x128xf32, #tpu.memory_space<vmem>>, vector<128x128xf32>,
    %c0_i32_11 = arith.constant 0 : i32
    %12 = arith.cmpi eq, %arg1, %c0_i32_11 : i32
    %13 = arith.extui %12 : i1 to i32
    %c0_i32_12 = arith.constant 0 : i32
    %14 = arith.cmpi ne, %13, %c0_i32_12 : i32
    scf.if %14 {
      %c0_13 = arith.constant 0 : index
      %c0_14 = arith.constant 0 : index
      %15 = vector.load %arg7[%c0_13, %c0_14] : memref<128x128xf32, #tpu.memory_space<vmem>>, vector<128x128xf32>
      %c0_15 = arith.constant 0 : index
      %c0_16 = arith.constant 0 : index
      %16 = vector.load %arg5[%c0_15, %c0_16] : memref<1x128xf32, #tpu.memory_space<vmem>>, vector<1x128xf32>
      %17 = vector.broadcast %16 : vector<1x128xf32> to vector<128x128xf32>
      %18 = arith.addf %15, %17 : vector<128x128xf32>
      %c0_17 = arith.constant 0 : index
      %c0_18 = arith.constant 0 : index
      %19 = vector.load %arg6[%c0_17, %c0_18] : memref<128x128xf32, #tpu.memory_space<vmem>>, vector<128x128xf32>
      tpu.vector_store %arg6[%c0_17, %c0_18], %18 {strides = array<i32>} : memref<128x128xf32, #tpu.memory_space<vmem>>, vector<128x128xf32>,
    } else {
    }
    return
  }
  func.func @transform_0(%arg0: i32, %arg1: i32) -> (i32, i32) {
    %c0_i32 = arith.constant 0 : i32
    return %arg0, %arg1 : i32, i32
  }
  func.func @transform_1(%arg0: i32, %arg1: i32) -> (i32, i32) {
    %c0_i32 = arith.constant 0 : i32
    %c0_i32_0 = arith.constant 0 : i32
    return %arg1, %c0_i32 : i32, i32
  }
  func.func @transform_2(%arg0: i32, %arg1: i32) -> (i32, i32) {
    %c0_i32 = arith.constant 0 : i32
    %c0_i32_0 = arith.constant 0 : i32
    %c0_i32_1 = arith.constant 0 : i32
    return %c0_i32, %c0_i32_0 : i32, i32
  }
  func.func @transform_3(%arg0: i32, %arg1: i32) -> (i32, i32) {
    %c0_i32 = arith.constant 0 : i32
    %c0_i32_0 = arith.constant 0 : i32
    %c0_i32_1 = arith.constant 0 : i32
    return %c0_i32, %c0_i32_0 : i32, i32
  }
  func.func @transform_4(%arg0: i32, %arg1: i32) -> (i32, i32) {
    %c0_i32 = arith.constant 0 : i32
    %c0_i32_0 = arith.constant 0 : i32
    return %arg0, %c0_i32 : i32, i32
  }
}

</mosaic_0001>

<llo_original>
// kernel: traditional_gcn_forward.3
$region0: #{traditional_gcn_forward.3}
  #allocation0 [shape = 'u32[]', space=smem, size = 0x4, offset = 0x4, fixed_abs, tag = 'smem constant byte address 0x4 - core index']
  #allocation1 [shape = 'u32[144,128]{1,0:T(1,128)}', space=vmem, size = 0x12000, scoped, tag = 'internal scratch']
  #allocation2 [shape = 'f32[128,128]{1,0:T(8,128)}', space=vmem, size = 0x10000, scoped, tag = 'scratch operand']
  %s0 = inlined_call_operand.vmem [shape: bf16[128,128], index: 0, kind: input, shape index: {}]
  %s1 = inlined_call_operand.vmem [shape: bf16[128,128], index: 1, kind: input, shape index: {}]
  %s2 = inlined_call_operand.vmem [shape: bf16[128,128], index: 2, kind: input, shape index: {}]
  %s3 = inlined_call_operand.vmem [shape: f32[1,128], index: 3, kind: input, shape index: {}]
  %s4 = inlined_call_operand.vmem [shape: f32[128,128], index: 4, kind: output, shape index: {}]
  %s5 = sld [smem:[#allocation0]]
  $region34: #{traditional_gcn_forward.3} parent=0
    _
  %s7 = ssub.s32 1, %s5
  %s8 = scalar_select 0, %s7, %s5
  // Predicated region
  $region2: #{traditional_gcn_forward.3} parent=0 // pred_check
    _
  $region3: #{traditional_gcn_forward.3} parent=0 // pred_check_branch
    %10 = sbr.rel (0) target = $region5
  $region4: #{traditional_gcn_forward.3} parent=0 // pred_region
    _
  $region5: #{traditional_gcn_forward.3} parent=0 // pred_fallthru
    _
  // Predicated region
  $region6: #{traditional_gcn_forward.3} parent=0 // pred_check
    _
  $region7: #{traditional_gcn_forward.3} parent=0 // pred_check_branch
    %12 = sbr.rel (0) target = $region9
  $region8: #{traditional_gcn_forward.3} parent=0 // pred_region
    _
  $region9: #{traditional_gcn_forward.3} parent=0 // pred_fallthru
    _
  // Predicated region
  $region10: #{traditional_gcn_forward.3} parent=0 // pred_check
    _
  $region11: #{traditional_gcn_forward.3} parent=0 // pred_check_branch
    %14 = sbr.rel (0) target = $region13
  $region12: #{traditional_gcn_forward.3} parent=0 // pred_region
    _
  $region13: #{traditional_gcn_forward.3} parent=0 // pred_fallthru
    _
  // Predicated region
  $region14: #{traditional_gcn_forward.3} parent=0 // pred_check
    _
  $region15: #{traditional_gcn_forward.3} parent=0 // pred_check_branch
    %16 = sbr.rel (0) target = $region17
  $region16: #{traditional_gcn_forward.3} parent=0 // pred_region
    _
  $region17: #{traditional_gcn_forward.3} parent=0 // pred_fallthru
    _
  %p18 = scmp.eq.s32.totalorder 0, 0
  // Predicated region
  $region18: #{traditional_gcn_forward.3} parent=0 // pred_check
    %p19 = pneg %p18
  $region19: #{traditional_gcn_forward.3} parent=0 // pred_check_branch
    %21 = sbr.rel (%p19) target = $region21
  $region20: #{traditional_gcn_forward.3} parent=0 // pred_region
    %22 = vst [vmem:[#allocation2] sm:$0xff] 0.0
    %23 = vst [vmem:[#allocation2 + $0x8] sm:$0xff] 0.0
    %24 = vst [vmem:[#allocation2 + $0x10] sm:$0xff] 0.0
    %25 = vst [vmem:[#allocation2 + $0x18] sm:$0xff] 0.0
    %26 = vst [vmem:[#allocation2 + $0x20] sm:$0xff] 0.0
    %27 = vst [vmem:[#allocation2 + $0x28] sm:$0xff] 0.0
    %28 = vst [vmem:[#allocation2 + $0x30] sm:$0xff] 0.0
    %29 = vst [vmem:[#allocation2 + $0x38] sm:$0xff] 0.0
    %30 = vst [vmem:[#allocation2 + $0x40] sm:$0xff] 0.0
    %31 = vst [vmem:[#allocation2 + $0x48] sm:$0xff] 0.0
    %32 = vst [vmem:[#allocation2 + $0x50] sm:$0xff] 0.0
    %33 = vst [vmem:[#allocation2 + $0x58] sm:$0xff] 0.0
    %34 = vst [vmem:[#allocation2 + $0x60] sm:$0xff] 0.0
    %35 = vst [vmem:[#allocation2 + $0x68] sm:$0xff] 0.0
    %36 = vst [vmem:[#allocation2 + $0x70] sm:$0xff] 0.0
    %37 = vst [vmem:[#allocation2 + $0x78] sm:$0xff] 0.0
  $region21: #{traditional_gcn_forward.3} parent=0 // pred_fallthru
    _
  %v38 = vld [vmem:[%s1] sm:$0xf]
  %v39 = vld [vmem:[%s1 + $0x4] sm:$0xf]
  %v40 = vld [vmem:[%s1 + $0x8] sm:$0xf]
  %v41 = vld [vmem:[%s1 + $0xc] sm:$0xf]
  %v42 = vld [vmem:[%s1 + $0x10] sm:$0xf]
  %v43 = vld [vmem:[%s1 + $0x14] sm:$0xf]
  %v44 = vld [vmem:[%s1 + $0x18] sm:$0xf]
  %v45 = vld [vmem:[%s1 + $0x1c] sm:$0xf]
  %v46 = vld [vmem:[%s1 + $0x20] sm:$0xf]
  %v47 = vld [vmem:[%s1 + $0x24] sm:$0xf]
  %v48 = vld [vmem:[%s1 + $0x28] sm:$0xf]
  %v49 = vld [vmem:[%s1 + $0x2c] sm:$0xf]
  %v50 = vld [vmem:[%s1 + $0x30] sm:$0xf]
  %v51 = vld [vmem:[%s1 + $0x34] sm:$0xf]
  %v52 = vld [vmem:[%s1 + $0x38] sm:$0xf]
  %v53 = vld [vmem:[%s1 + $0x3c] sm:$0xf]
  %v54 = vld [vmem:[%s2] sm:$0xf]
  %v55 = vld [vmem:[%s2 + $0x4] sm:$0xf]
  %v56 = vld [vmem:[%s2 + $0x8] sm:$0xf]
  %v57 = vld [vmem:[%s2 + $0xc] sm:$0xf]
  %v58 = vld [vmem:[%s2 + $0x10] sm:$0xf]
  %v59 = vld [vmem:[%s2 + $0x14] sm:$0xf]
  %v60 = vld [vmem:[%s2 + $0x18] sm:$0xf]
  %v61 = vld [vmem:[%s2 + $0x1c] sm:$0xf]
  %v62 = vld [vmem:[%s2 + $0x20] sm:$0xf]
  %v63 = vld [vmem:[%s2 + $0x24] sm:$0xf]
  %v64 = vld [vmem:[%s2 + $0x28] sm:$0xf]
  %v65 = vld [vmem:[%s2 + $0x2c] sm:$0xf]
  %v66 = vld [vmem:[%s2 + $0x30] sm:$0xf]
  %v67 = vld [vmem:[%s2 + $0x34] sm:$0xf]
  %v68 = vld [vmem:[%s2 + $0x38] sm:$0xf]
  %v69 = vld [vmem:[%s2 + $0x3c] sm:$0xf]
  %v86 = vunpack.c.l.b16 %v38
  %v87 = vunpack.c.l.b16 %v39
  %v88 = vunpack.c.l.b16 %v40
  %v89 = vunpack.c.l.b16 %v41
  %v90 = vunpack.c.l.b16 %v42
  %v91 = vunpack.c.l.b16 %v43
  %v92 = vunpack.c.l.b16 %v44
  %v93 = vunpack.c.l.b16 %v45
  %v94 = vunpack.c.l.b16 %v46
  %v95 = vunpack.c.l.b16 %v47
  %v96 = vunpack.c.l.b16 %v48
  %v97 = vunpack.c.l.b16 %v49
  %v98 = vunpack.c.l.b16 %v50
  %v99 = vunpack.c.l.b16 %v51
  %v100 = vunpack.c.l.b16 %v52
  %v101 = vunpack.c.l.b16 %v53
  %v102 = vpack.c.b16 %v87, %v86
  %v103 = vpack.c.b16 %v89, %v88
  %v104 = vpack.c.b16 %v91, %v90
  %v105 = vpack.c.b16 %v93, %v92
  %v106 = vpack.c.b16 %v95, %v94
  %v107 = vpack.c.b16 %v97, %v96
  %v108 = vpack.c.b16 %v99, %v98
  %v109 = vpack.c.b16 %v101, %v100
  %v134 = vunpack.c.l.b16 %v54
  %v135 = vunpack.c.l.b16 %v55
  %v136 = vunpack.c.l.b16 %v56
  %v137 = vunpack.c.l.b16 %v57
  %v138 = vunpack.c.l.b16 %v58
  %v139 = vunpack.c.l.b16 %v59
  %v140 = vunpack.c.l.b16 %v60
  %v141 = vunpack.c.l.b16 %v61
  %v142 = vunpack.c.l.b16 %v62
  %v143 = vunpack.c.l.b16 %v63
  %v144 = vunpack.c.l.b16 %v64
  %v145 = vunpack.c.l.b16 %v65
  %v146 = vunpack.c.l.b16 %v66
  %v147 = vunpack.c.l.b16 %v67
  %v148 = vunpack.c.l.b16 %v68
  %v149 = vunpack.c.l.b16 %v69
  %v150 = vpack.c.b16 %v135, %v134
  %v151 = vpack.c.b16 %v137, %v136
  %v152 = vpack.c.b16 %v139, %v138
  %v153 = vpack.c.b16 %v141, %v140
  %v154 = vpack.c.b16 %v143, %v142
  %v155 = vpack.c.b16 %v145, %v144
  %v156 = vpack.c.b16 %v147, %v146
  %v157 = vpack.c.b16 %v149, %v148
  %166 = vmatprep.subr.bf16.mxu0 0
  %167 = vmatpush1.bf16.msra.mxu0 %v150
  %168 = vmatprep.subr.bf16.mxu0 0
  %169 = vmatpush1.bf16.msra.mxu0 %v151
  %170 = vmatprep.subr.bf16.mxu0 0
  %171 = vmatpush1.bf16.msra.mxu0 %v152
  %172 = vmatprep.subr.bf16.mxu0 0
  %173 = vmatpush1.bf16.msra.mxu0 %v153
  %174 = vmatprep.subr.bf16.mxu0 0
  %175 = vmatpush1.bf16.msra.mxu0 %v154
  %176 = vmatprep.subr.bf16.mxu0 0
  %177 = vmatpush1.bf16.msra.mxu0 %v155
  %178 = vmatprep.subr.bf16.mxu0 0
  %179 = vmatpush1.bf16.msra.mxu0 %v156
  %180 = vmatprep.subr.bf16.mxu0 0
  %181 = vmatpush1.bf16.msra.mxu0 %v157
  %182 = vmatprep.subr.bf16.mxu0 0
  %183 = vmatpush1.bf16.msra.mxu0 0
  %184 = vmatprep.subr.bf16.mxu0 0
  %185 = vmatpush1.bf16.msra.mxu0 0
  %186 = vmatprep.subr.bf16.mxu0 0
  %187 = vmatpush1.bf16.msra.mxu0 0
  %188 = vmatprep.subr.bf16.mxu0 0
  %189 = vmatpush1.bf16.msra.mxu0 0
  %190 = vmatprep.subr.bf16.mxu0 0
  %191 = vmatpush1.bf16.msra.mxu0 0
  %192 = vmatprep.subr.bf16.mxu0 0
  %193 = vmatpush1.bf16.msra.mxu0 0
  %194 = vmatprep.subr.bf16.mxu0 0
  %195 = vmatpush1.bf16.msra.mxu0 0
  %196 = vmatprep.subr.bf16.mxu0 0
  %197 = vmatpush1.bf16.msra.mxu0 0
  %198 = vmatprep.mubr.bf16.mxu0 0
  %199 = vmatmul.mubr.bf16.gmra.mrb[0].mxu0 %v102
  %v200 = vpop.f32.mrb[0].mxu0
  %v201 = vadd.f32 0.0, %v200
  %v202 = vpop.f32.mrb[0].mxu0
  %v203 = vpop.f32.mrb[0].mxu0
  %v204 = vadd.f32 0.0, %v203
  %v205 = vpop.f32.mrb[0].mxu0
  %206 = vmatprep.mubr.bf16.mxu0 0
  %207 = vmatmul.mubr.bf16.gmra.mrb[0].mxu0 %v103
  %v208 = vpop.f32.mrb[0].mxu0
  %v209 = vadd.f32 0.0, %v208
  %v210 = vpop.f32.mrb[0].mxu0
  %v211 = vpop.f32.mrb[0].mxu0
  %v212 = vadd.f32 0.0, %v211
  %v213 = vpop.f32.mrb[0].mxu0
  %214 = vmatprep.mubr.bf16.mxu0 0
  %215 = vmatmul.mubr.bf16.gmra.mrb[0].mxu0 %v104
  %v216 = vpop.f32.mrb[0].mxu0
  %v217 = vadd.f32 0.0, %v216
  %v218 = vpop.f32.mrb[0].mxu0
  %v219 = vpop.f32.mrb[0].mxu0
  %v220 = vadd.f32 0.0, %v219
  %v221 = vpop.f32.mrb[0].mxu0
  %222 = vmatprep.mubr.bf16.mxu0 0
  %223 = vmatmul.mubr.bf16.gmra.mrb[0].mxu0 %v105
  %v224 = vpop.f32.mrb[0].mxu0
  %v225 = vadd.f32 0.0, %v224
  %v226 = vpop.f32.mrb[0].mxu0
  %v227 = vpop.f32.mrb[0].mxu0
  %v228 = vadd.f32 0.0, %v227
  %v229 = vpop.f32.mrb[0].mxu0
  %230 = vmatprep.mubr.bf16.mxu0 0
  %231 = vmatmul.mubr.bf16.gmra.mrb[0].mxu0 %v106
  %v232 = vpop.f32.mrb[0].mxu0
  %v233 = vadd.f32 0.0, %v232
  %v234 = vpop.f32.mrb[0].mxu0
  %v235 = vpop.f32.mrb[0].mxu0
  %v236 = vadd.f32 0.0, %v235
  %v237 = vpop.f32.mrb[0].mxu0
  %238 = vmatprep.mubr.bf16.mxu0 0
  %239 = vmatmul.mubr.bf16.gmra.mrb[0].mxu0 %v107
  %v240 = vpop.f32.mrb[0].mxu0
  %v241 = vadd.f32 0.0, %v240
  %v242 = vpop.f32.mrb[0].mxu0
  %v243 = vpop.f32.mrb[0].mxu0
  %v244 = vadd.f32 0.0, %v243
  %v245 = vpop.f32.mrb[0].mxu0
  %246 = vmatprep.mubr.bf16.mxu0 0
  %247 = vmatmul.mubr.bf16.gmra.mrb[0].mxu0 %v108
  %v248 = vpop.f32.mrb[0].mxu0
  %v249 = vadd.f32 0.0, %v248
  %v250 = vpop.f32.mrb[0].mxu0
  %v251 = vpop.f32.mrb[0].mxu0
  %v252 = vadd.f32 0.0, %v251
  %v253 = vpop.f32.mrb[0].mxu0
  %254 = vmatprep.mubr.bf16.mxu0 0
  %255 = vmatmul.mubr.bf16.gmra.mrb[0].mxu0 %v109
  %v256 = vpop.f32.mrb[0].mxu0
  %v257 = vadd.f32 0.0, %v256
  %v258 = vpop.f32.mrb[0].mxu0
  %v259 = vpop.f32.mrb[0].mxu0
  %v260 = vadd.f32 0.0, %v259
  %v261 = vpop.f32.mrb[0].mxu0
  %262 = vdwg.mxu0
  %v263 = vld [vmem:[#allocation2] sm:$0xff]
  %v264 = vld [vmem:[#allocation2 + $0x8] sm:$0xff]
  %v265 = vld [vmem:[#allocation2 + $0x10] sm:$0xff]
  %v266 = vld [vmem:[#allocation2 + $0x18] sm:$0xff]
  %v267 = vld [vmem:[#allocation2 + $0x20] sm:$0xff]
  %v268 = vld [vmem:[#allocation2 + $0x28] sm:$0xff]
  %v269 = vld [vmem:[#allocation2 + $0x30] sm:$0xff]
  %v270 = vld [vmem:[#allocation2 + $0x38] sm:$0xff]
  %v271 = vld [vmem:[#allocation2 + $0x40] sm:$0xff]
  %v272 = vld [vmem:[#allocation2 + $0x48] sm:$0xff]
  %v273 = vld [vmem:[#allocation2 + $0x50] sm:$0xff]
  %v274 = vld [vmem:[#allocation2 + $0x58] sm:$0xff]
  %v275 = vld [vmem:[#allocation2 + $0x60] sm:$0xff]
  %v276 = vld [vmem:[#allocation2 + $0x68] sm:$0xff]
  %v277 = vld [vmem:[#allocation2 + $0x70] sm:$0xff]
  %v278 = vld [vmem:[#allocation2 + $0x78] sm:$0xff]
  %v279 = vld [vmem:[%s0] sm:$0xf]
  %v280 = vld [vmem:[%s0 + $0x4] sm:$0xf]
  %v281 = vld [vmem:[%s0 + $0x8] sm:$0xf]
  %v282 = vld [vmem:[%s0 + $0xc] sm:$0xf]
  %v283 = vld [vmem:[%s0 + $0x10] sm:$0xf]
  %v284 = vld [vmem:[%s0 + $0x14] sm:$0xf]
  %v285 = vld [vmem:[%s0 + $0x18] sm:$0xf]
  %v286 = vld [vmem:[%s0 + $0x1c] sm:$0xf]
  %v287 = vld [vmem:[%s0 + $0x20] sm:$0xf]
  %v288 = vld [vmem:[%s0 + $0x24] sm:$0xf]
  %v289 = vld [vmem:[%s0 + $0x28] sm:$0xf]
  %v290 = vld [vmem:[%s0 + $0x2c] sm:$0xf]
  %v291 = vld [vmem:[%s0 + $0x30] sm:$0xf]
  %v292 = vld [vmem:[%s0 + $0x34] sm:$0xf]
  %v293 = vld [vmem:[%s0 + $0x38] sm:$0xf]
  %v294 = vld [vmem:[%s0 + $0x3c] sm:$0xf]
  %v295 = vpack.c.bf16 %v204, %v201
  %v296 = vpack.c.bf16 %v212, %v209
  %v297 = vpack.c.bf16 %v220, %v217
  %v298 = vpack.c.bf16 %v228, %v225
  %v299 = vpack.c.bf16 %v236, %v233
  %v300 = vpack.c.bf16 %v244, %v241
  %v301 = vpack.c.bf16 %v252, %v249
  %v302 = vpack.c.bf16 %v260, %v257
  %v319 = vunpack.c.l.b16 %v279
  %v320 = vunpack.c.l.b16 %v280
  %v321 = vunpack.c.l.b16 %v281
  %v322 = vunpack.c.l.b16 %v282
  %v323 = vunpack.c.l.b16 %v283
  %v324 = vunpack.c.l.b16 %v284
  %v325 = vunpack.c.l.b16 %v285
  %v326 = vunpack.c.l.b16 %v286
  %v327 = vunpack.c.l.b16 %v287
  %v328 = vunpack.c.l.b16 %v288
  %v329 = vunpack.c.l.b16 %v289
  %v330 = vunpack.c.l.b16 %v290
  %v331 = vunpack.c.l.b16 %v291
  %v332 = vunpack.c.l.b16 %v292
  %v333 = vunpack.c.l.b16 %v293
  %v334 = vunpack.c.l.b16 %v294
  %v335 = vpack.c.b16 %v320, %v319
  %v336 = vpack.c.b16 %v322, %v321
  %v337 = vpack.c.b16 %v324, %v323
  %v338 = vpack.c.b16 %v326, %v325
  %v339 = vpack.c.b16 %v328, %v327
  %v340 = vpack.c.b16 %v330, %v329
  %v341 = vpack.c.b16 %v332, %v331
  %v342 = vpack.c.b16 %v334, %v333
  %351 = vmatprep.subr.bf16.mxu0 0
  %352 = vmatpush1.bf16.msra.mxu0 %v295
  %353 = vmatprep.subr.bf16.mxu0 0
  %354 = vmatpush1.bf16.msra.mxu0 %v296
  %355 = vmatprep.subr.bf16.mxu0 0
  %356 = vmatpush1.bf16.msra.mxu0 %v297
  %357 = vmatprep.subr.bf16.mxu0 0
  %358 = vmatpush1.bf16.msra.mxu0 %v298
  %359 = vmatprep.subr.bf16.mxu0 0
  %360 = vmatpush1.bf16.msra.mxu0 %v299
  %361 = vmatprep.subr.bf16.mxu0 0
  %362 = vmatpush1.bf16.msra.mxu0 %v300
  %363 = vmatprep.subr.bf16.mxu0 0
  %364 = vmatpush1.bf16.msra.mxu0 %v301
  %365 = vmatprep.subr.bf16.mxu0 0
  %366 = vmatpush1.bf16.msra.mxu0 %v302
  %367 = vmatprep.subr.bf16.mxu0 0
  %368 = vmatpush1.bf16.msra.mxu0 0
  %369 = vmatprep.subr.bf16.mxu0 0
  %370 = vmatpush1.bf16.msra.mxu0 0
  %371 = vmatprep.subr.bf16.mxu0 0
  %372 = vmatpush1.bf16.msra.mxu0 0
  %373 = vmatprep.subr.bf16.mxu0 0
  %374 = vmatpush1.bf16.msra.mxu0 0
  %375 = vmatprep.subr.bf16.mxu0 0
  %376 = vmatpush1.bf16.msra.mxu0 0
  %377 = vmatprep.subr.bf16.mxu0 0
  %378 = vmatpush1.bf16.msra.mxu0 0
  %379 = vmatprep.subr.bf16.mxu0 0
  %380 = vmatpush1.bf16.msra.mxu0 0
  %381 = vmatprep.subr.bf16.mxu0 0
  %382 = vmatpush1.bf16.msra.mxu0 0
  %383 = vmatprep.mubr.bf16.mxu0 0
  %384 = vmatmul.mubr.bf16.gmra.mrb[0].mxu0 %v335
  %v385 = vpop.f32.mrb[0].mxu0
  %v386 = vadd.f32 0.0, %v385
  %v387 = vpop.f32.mrb[0].mxu0
  %v388 = vpop.f32.mrb[0].mxu0
  %v389 = vadd.f32 0.0, %v388
  %v390 = vpop.f32.mrb[0].mxu0
  %391 = vmatprep.mubr.bf16.mxu0 0
  %392 = vmatmul.mubr.bf16.gmra.mrb[0].mxu0 %v336
  %v393 = vpop.f32.mrb[0].mxu0
  %v394 = vadd.f32 0.0, %v393
  %v395 = vpop.f32.mrb[0].mxu0
  %v396 = vpop.f32.mrb[0].mxu0
  %v397 = vadd.f32 0.0, %v396
  %v398 = vpop.f32.mrb[0].mxu0
  %399 = vmatprep.mubr.bf16.mxu0 0
  %400 = vmatmul.mubr.bf16.gmra.mrb[0].mxu0 %v337
  %v401 = vpop.f32.mrb[0].mxu0
  %v402 = vadd.f32 0.0, %v401
  %v403 = vpop.f32.mrb[0].mxu0
  %v404 = vpop.f32.mrb[0].mxu0
  %v405 = vadd.f32 0.0, %v404
  %v406 = vpop.f32.mrb[0].mxu0
  %407 = vmatprep.mubr.bf16.mxu0 0
  %408 = vmatmul.mubr.bf16.gmra.mrb[0].mxu0 %v338
  %v409 = vpop.f32.mrb[0].mxu0
  %v410 = vadd.f32 0.0, %v409
  %v411 = vpop.f32.mrb[0].mxu0
  %v412 = vpop.f32.mrb[0].mxu0
  %v413 = vadd.f32 0.0, %v412
  %v414 = vpop.f32.mrb[0].mxu0
  %415 = vmatprep.mubr.bf16.mxu0 0
  %416 = vmatmul.mubr.bf16.gmra.mrb[0].mxu0 %v339
  %v417 = vpop.f32.mrb[0].mxu0
  %v418 = vadd.f32 0.0, %v417
  %v419 = vpop.f32.mrb[0].mxu0
  %v420 = vpop.f32.mrb[0].mxu0
  %v421 = vadd.f32 0.0, %v420
  %v422 = vpop.f32.mrb[0].mxu0
  %423 = vmatprep.mubr.bf16.mxu0 0
  %424 = vmatmul.mubr.bf16.gmra.mrb[0].mxu0 %v340
  %v425 = vpop.f32.mrb[0].mxu0
  %v426 = vadd.f32 0.0, %v425
  %v427 = vpop.f32.mrb[0].mxu0
  %v428 = vpop.f32.mrb[0].mxu0
  %v429 = vadd.f32 0.0, %v428
  %v430 = vpop.f32.mrb[0].mxu0
  %431 = vmatprep.mubr.bf16.mxu0 0
  %432 = vmatmul.mubr.bf16.gmra.mrb[0].mxu0 %v341
  %v433 = vpop.f32.mrb[0].mxu0
  %v434 = vadd.f32 0.0, %v433
  %v435 = vpop.f32.mrb[0].mxu0
  %v436 = vpop.f32.mrb[0].mxu0
  %v437 = vadd.f32 0.0, %v436
  %v438 = vpop.f32.mrb[0].mxu0
  %439 = vmatprep.mubr.bf16.mxu0 0
  %440 = vmatmul.mubr.bf16.gmra.mrb[0].mxu0 %v342
  %v441 = vpop.f32.mrb[0].mxu0
  %v442 = vadd.f32 0.0, %v441
  %v443 = vpop.f32.mrb[0].mxu0
  %v444 = vpop.f32.mrb[0].mxu0
  %v445 = vadd.f32 0.0, %v444
  %v446 = vpop.f32.mrb[0].mxu0
  %447 = vdwg.mxu0
  %v448 = vadd.f32 %v263, %v386
  %v449 = vadd.f32 %v264, %v389
  %v450 = vadd.f32 %v265, %v394
  %v451 = vadd.f32 %v266, %v397
  %v452 = vadd.f32 %v267, %v402
  %v453 = vadd.f32 %v268, %v405
  %v454 = vadd.f32 %v269, %v410
  %v455 = vadd.f32 %v270, %v413
  %v456 = vadd.f32 %v271, %v418
  %v457 = vadd.f32 %v272, %v421
  %v458 = vadd.f32 %v273, %v426
  %v459 = vadd.f32 %v274, %v429
  %v460 = vadd.f32 %v275, %v434
  %v461 = vadd.f32 %v276, %v437
  %v462 = vadd.f32 %v277, %v442
  %v463 = vadd.f32 %v278, %v445
  %464 = vst [vmem:[#allocation2] sm:$0xff] %v448
  %465 = vst [vmem:[#allocation2 + $0x8] sm:$0xff] %v449
  %466 = vst [vmem:[#allocation2 + $0x10] sm:$0xff] %v450
  %467 = vst [vmem:[#allocation2 + $0x18] sm:$0xff] %v451
  %468 = vst [vmem:[#allocation2 + $0x20] sm:$0xff] %v452
  %469 = vst [vmem:[#allocation2 + $0x28] sm:$0xff] %v453
  %470 = vst [vmem:[#allocation2 + $0x30] sm:$0xff] %v454
  %471 = vst [vmem:[#allocation2 + $0x38] sm:$0xff] %v455
  %472 = vst [vmem:[#allocation2 + $0x40] sm:$0xff] %v456
  %473 = vst [vmem:[#allocation2 + $0x48] sm:$0xff] %v457
  %474 = vst [vmem:[#allocation2 + $0x50] sm:$0xff] %v458
  %475 = vst [vmem:[#allocation2 + $0x58] sm:$0xff] %v459
  %476 = vst [vmem:[#allocation2 + $0x60] sm:$0xff] %v460
  %477 = vst [vmem:[#allocation2 + $0x68] sm:$0xff] %v461
  %478 = vst [vmem:[#allocation2 + $0x70] sm:$0xff] %v462
  %479 = vst [vmem:[#allocation2 + $0x78] sm:$0xff] %v463
  // Predicated region
  $region22: #{traditional_gcn_forward.3} parent=0 // pred_check
    %p480 = pneg %p18
  $region23: #{traditional_gcn_forward.3} parent=0 // pred_check_branch
    %482 = sbr.rel (%p480) target = $region25
  $region24: #{traditional_gcn_forward.3} parent=0 // pred_region
    %v483 = vld [vmem:[#allocation2] sm:$0xff]
    %v484 = vld [vmem:[#allocation2 + $0x8] sm:$0xff]
    %v485 = vld [vmem:[#allocation2 + $0x10] sm:$0xff]
    %v486 = vld [vmem:[#allocation2 + $0x18] sm:$0xff]
    %v487 = vld [vmem:[#allocation2 + $0x20] sm:$0xff]
    %v488 = vld [vmem:[#allocation2 + $0x28] sm:$0xff]
    %v489 = vld [vmem:[#allocation2 + $0x30] sm:$0xff]
    %v490 = vld [vmem:[#allocation2 + $0x38] sm:$0xff]
    %v491 = vld [vmem:[#allocation2 + $0x40] sm:$0xff]
    %v492 = vld [vmem:[#allocation2 + $0x48] sm:$0xff]
    %v493 = vld [vmem:[#allocation2 + $0x50] sm:$0xff]
    %v494 = vld [vmem:[#allocation2 + $0x58] sm:$0xff]
    %v495 = vld [vmem:[#allocation2 + $0x60] sm:$0xff]
    %v496 = vld [vmem:[#allocation2 + $0x68] sm:$0xff]
    %v497 = vld [vmem:[#allocation2 + $0x70] sm:$0xff]
    %v498 = vld [vmem:[#allocation2 + $0x78] sm:$0xff]
    %v499 = vld [vmem:[%s3] sm:$0x1]
    %v501 = vlaneseq
    %v502 = vshrl.u32 %v501, 7
    %v503 = vsub.s32 0, %v502
    %v504 = vrot.slane %v499, %v503
    %v506 = vadd.f32 %v483, %v504
    %v507 = vadd.f32 %v484, %v504
    %v508 = vadd.f32 %v485, %v504
    %v509 = vadd.f32 %v486, %v504
    %v510 = vadd.f32 %v487, %v504
    %v511 = vadd.f32 %v488, %v504
    %v512 = vadd.f32 %v489, %v504
    %v513 = vadd.f32 %v490, %v504
    %v514 = vadd.f32 %v491, %v504
    %v515 = vadd.f32 %v492, %v504
    %v516 = vadd.f32 %v493, %v504
    %v517 = vadd.f32 %v494, %v504
    %v518 = vadd.f32 %v495, %v504
    %v519 = vadd.f32 %v496, %v504
    %v520 = vadd.f32 %v497, %v504
    %v521 = vadd.f32 %v498, %v504
    %522 = vst [vmem:[%s4] sm:$0xff] %v506
    %523 = vst [vmem:[%s4 + $0x8] sm:$0xff] %v507
    %524 = vst [vmem:[%s4 + $0x10] sm:$0xff] %v508
    %525 = vst [vmem:[%s4 + $0x18] sm:$0xff] %v509
    %526 = vst [vmem:[%s4 + $0x20] sm:$0xff] %v510
    %527 = vst [vmem:[%s4 + $0x28] sm:$0xff] %v511
    %528 = vst [vmem:[%s4 + $0x30] sm:$0xff] %v512
    %529 = vst [vmem:[%s4 + $0x38] sm:$0xff] %v513
    %530 = vst [vmem:[%s4 + $0x40] sm:$0xff] %v514
    %531 = vst [vmem:[%s4 + $0x48] sm:$0xff] %v515
    %532 = vst [vmem:[%s4 + $0x50] sm:$0xff] %v516
    %533 = vst [vmem:[%s4 + $0x58] sm:$0xff] %v517
    %534 = vst [vmem:[%s4 + $0x60] sm:$0xff] %v518
    %535 = vst [vmem:[%s4 + $0x68] sm:$0xff] %v519
    %536 = vst [vmem:[%s4 + $0x70] sm:$0xff] %v520
    %537 = vst [vmem:[%s4 + $0x78] sm:$0xff] %v521
  $region25: #{traditional_gcn_forward.3} parent=0 // pred_fallthru
    _
  // Predicated region
  $region26: #{traditional_gcn_forward.3} parent=0 // pred_check
    _
  $region27: #{traditional_gcn_forward.3} parent=0 // pred_check_branch
    %539 = sbr.rel (0) target = $region29
  $region28: #{traditional_gcn_forward.3} parent=0 // pred_region
    _
  $region29: #{traditional_gcn_forward.3} parent=0 // pred_fallthru
    _
  // Predicated region
  $region30: #{traditional_gcn_forward.3} parent=0 // pred_check
    _
  $region31: #{traditional_gcn_forward.3} parent=0 // pred_check_branch
    %541 = sbr.rel (0) target = $region33
  $region32: #{traditional_gcn_forward.3} parent=0 // pred_region
    _
  $region33: #{traditional_gcn_forward.3} parent=0 // pred_fallthru
    _

// kernel: traditional_gcn_forward.2
$region0: #{traditional_gcn_forward.2}
  #allocation0 [shape = 'u32[]', space=smem, size = 0x4, offset = 0x4, fixed_abs, tag = 'smem constant byte address 0x4 - core index']
  #allocation1 [shape = 'u32[144,128]{1,0:T(1,128)}', space=vmem, size = 0x12000, scoped, tag = 'internal scratch']
  #allocation2 [shape = 'f32[128,128]{1,0:T(8,128)}', space=vmem, size = 0x10000, scoped, tag = 'scratch operand']
  %s0 = inlined_call_operand.hbm [shape: bf16[128,128], index: 0, kind: input, shape index: {}]
  %s1 = inlined_call_operand.hbm [shape: bf16[128,128], index: 1, kind: input, shape index: {}]
  %s2 = inlined_call_operand.hbm [shape: bf16[128,128], index: 2, kind: input, shape index: {}]
  %s3 = inlined_call_operand.vmem [shape: f32[1,128], index: 3, kind: input, shape index: {}]
  %s4 = inlined_call_operand.vmem [shape: bf16[128,128], index: 4, kind: output, shape index: {}]
  %s5 = sld [smem:[#allocation0]]
  $region46: #{traditional_gcn_forward.2} parent=0
    _
  %s7 = ssub.s32 1, %s5
  %s8 = scalar_select 0, %s7, %s5
  $region1: #{traditional_gcn_forward.2} parent=0
    #allocation3 [shape = 'u8[32768]{0}', space=vmem, size = 0x8000, scoped, tag = 'input window, operand 0, single buffered']
    #allocation4 [shape = 's32[1]{0}', space=sflag, size = 0x4, scoped, tag = 'scoped memory for traditional_gcn_forward.2']
    #allocation5 [shape = 'u8[32768]{0}', space=vmem, size = 0x8000, scoped, tag = 'input window, operand 1, single buffered']
    #allocation6 [shape = 's32[1]{0}', space=sflag, size = 0x4, scoped, tag = 'scoped memory for traditional_gcn_forward.2']
    #allocation7 [shape = 'u8[32768]{0}', space=vmem, size = 0x8000, scoped, tag = 'input window, operand 2, single buffered']
    %9 = vsyncpa [#allocation4], 0
    %10 = vsyncpa [#allocation6], 0
    // Predicated region
    $region2: #{traditional_gcn_forward.2} parent=1 // pred_check
      _
    $region3: #{traditional_gcn_forward.2} parent=1 // pred_check_branch
      %12 = sbr.rel (0) target = $region5
    $region4: #{traditional_gcn_forward.2} parent=1 // pred_region
      %s14 = ssub.s32 1024, 1024
      %15 = vsyncadd [#allocation4], %s14
      %s16 = sshll.u32 [#allocation3], 4
      %s17 = int_to_ptr.vmem [resolvable:$true] %s16
      %22 = dma.hbm_to_vmem [thread:$0]  %s0, 1024, %s17, [#allocation4], 64, 64, 4
    $region5: #{traditional_gcn_forward.2} parent=1 // pred_fallthru
      _
    // Predicated region
    $region6: #{traditional_gcn_forward.2} parent=1 // pred_check
      _
    $region7: #{traditional_gcn_forward.2} parent=1 // pred_check_branch
      %24 = sbr.rel (0) target = $region9
    $region8: #{traditional_gcn_forward.2} parent=1 // pred_region
      %s26 = ssub.s32 1024, 1024
      %27 = vsyncadd [#allocation6], %s26
      %s28 = sshll.u32 [#allocation5], 4
      %s29 = int_to_ptr.vmem [resolvable:$true] %s28
      %34 = dma.hbm_to_vmem [thread:$0]  %s1, 1024, %s29, [#allocation6], 64, 64, 4
    $region9: #{traditional_gcn_forward.2} parent=1 // pred_fallthru
      _
    // Predicated region
    $region10: #{traditional_gcn_forward.2} parent=1 // pred_check
      _
    $region11: #{traditional_gcn_forward.2} parent=1 // pred_check_branch
      %36 = sbr.rel (0) target = $region13
    $region12: #{traditional_gcn_forward.2} parent=1 // pred_region
      %s38 = ssub.s32 1024, 1024
      %39 = vsyncadd [#allocation6], %s38
      %s40 = sshll.u32 [#allocation7], 4
      %s41 = int_to_ptr.vmem [resolvable:$true] %s40
      %46 = dma.hbm_to_vmem [thread:$0]  %s2, 1024, %s41, [#allocation6], 64, 64, 4
    $region13: #{traditional_gcn_forward.2} parent=1 // pred_fallthru
      _
    // Predicated region
    $region14: #{traditional_gcn_forward.2} parent=1 // pred_check
      _
    $region15: #{traditional_gcn_forward.2} parent=1 // pred_check_branch
      %48 = sbr.rel (0) target = $region17
    $region16: #{traditional_gcn_forward.2} parent=1 // pred_region
      _
    $region17: #{traditional_gcn_forward.2} parent=1 // pred_fallthru
      _
    // Predicated region
    $region18: #{traditional_gcn_forward.2} parent=1 // pred_check
      _
    $region19: #{traditional_gcn_forward.2} parent=1 // pred_check_branch
      %50 = sbr.rel (0) target = $region21
    $region20: #{traditional_gcn_forward.2} parent=1 // pred_region
      %51 = dma.done [#allocation4], 1024
    $region21: #{traditional_gcn_forward.2} parent=1 // pred_fallthru
      _
    // Predicated region
    $region22: #{traditional_gcn_forward.2} parent=1 // pred_check
      _
    $region23: #{traditional_gcn_forward.2} parent=1 // pred_check_branch
      %53 = sbr.rel (0) target = $region25
    $region24: #{traditional_gcn_forward.2} parent=1 // pred_region
      %54 = dma.done [#allocation6], 1024
    $region25: #{traditional_gcn_forward.2} parent=1 // pred_fallthru
      _
    // Predicated region
    $region26: #{traditional_gcn_forward.2} parent=1 // pred_check
      _
    $region27: #{traditional_gcn_forward.2} parent=1 // pred_check_branch
      %56 = sbr.rel (0) target = $region29
    $region28: #{traditional_gcn_forward.2} parent=1 // pred_region
      %57 = dma.done [#allocation6], 1024
    $region29: #{traditional_gcn_forward.2} parent=1 // pred_fallthru
      _
    %p59 = scmp.eq.s32.totalorder 0, 0
    // Predicated region
    $region30: #{traditional_gcn_forward.2} parent=1 // pred_check
      %p60 = pneg %p59
    $region31: #{traditional_gcn_forward.2} parent=1 // pred_check_branch
      %62 = sbr.rel (%p60) target = $region33
    $region32: #{traditional_gcn_forward.2} parent=1 // pred_region
      %63 = vst [vmem:[#allocation2] sm:$0xff] 0.0
      %64 = vst [vmem:[#allocation2 + $0x8] sm:$0xff] 0.0
      %65 = vst [vmem:[#allocation2 + $0x10] sm:$0xff] 0.0
      %66 = vst [vmem:[#allocation2 + $0x18] sm:$0xff] 0.0
      %67 = vst [vmem:[#allocation2 + $0x20] sm:$0xff] 0.0
      %68 = vst [vmem:[#allocation2 + $0x28] sm:$0xff] 0.0
      %69 = vst [vmem:[#allocation2 + $0x30] sm:$0xff] 0.0
      %70 = vst [vmem:[#allocation2 + $0x38] sm:$0xff] 0.0
      %71 = vst [vmem:[#allocation2 + $0x40] sm:$0xff] 0.0
      %72 = vst [vmem:[#allocation2 + $0x48] sm:$0xff] 0.0
      %73 = vst [vmem:[#allocation2 + $0x50] sm:$0xff] 0.0
      %74 = vst [vmem:[#allocation2 + $0x58] sm:$0xff] 0.0
      %75 = vst [vmem:[#allocation2 + $0x60] sm:$0xff] 0.0
      %76 = vst [vmem:[#allocation2 + $0x68] sm:$0xff] 0.0
      %77 = vst [vmem:[#allocation2 + $0x70] sm:$0xff] 0.0
      %78 = vst [vmem:[#allocation2 + $0x78] sm:$0xff] 0.0
    $region33: #{traditional_gcn_forward.2} parent=1 // pred_fallthru
      _
    %v79 = vld [vmem:[#allocation5] sm:$0xf]
    %v80 = vld [vmem:[#allocation5 + $0x4] sm:$0xf]
    %v81 = vld [vmem:[#allocation5 + $0x8] sm:$0xf]
    %v82 = vld [vmem:[#allocation5 + $0xc] sm:$0xf]
    %v83 = vld [vmem:[#allocation5 + $0x10] sm:$0xf]
    %v84 = vld [vmem:[#allocation5 + $0x14] sm:$0xf]
    %v85 = vld [vmem:[#allocation5 + $0x18] sm:$0xf]
    %v86 = vld [vmem:[#allocation5 + $0x1c] sm:$0xf]
    %v87 = vld [vmem:[#allocation5 + $0x20] sm:$0xf]
    %v88 = vld [vmem:[#allocation5 + $0x24] sm:$0xf]
    %v89 = vld [vmem:[#allocation5 + $0x28] sm:$0xf]
    %v90 = vld [vmem:[#allocation5 + $0x2c] sm:$0xf]
    %v91 = vld [vmem:[#allocation5 + $0x30] sm:$0xf]
    %v92 = vld [vmem:[#allocation5 + $0x34] sm:$0xf]
    %v93 = vld [vmem:[#allocation5 + $0x38] sm:$0xf]
    %v94 = vld [vmem:[#allocation5 + $0x3c] sm:$0xf]
    %v95 = vld [vmem:[#allocation7] sm:$0xf]
    %v96 = vld [vmem:[#allocation7 + $0x4] sm:$0xf]
    %v97 = vld [vmem:[#allocation7 + $0x8] sm:$0xf]
    %v98 = vld [vmem:[#allocation7 + $0xc] sm:$0xf]
    %v99 = vld [vmem:[#allocation7 + $0x10] sm:$0xf]
    %v100 = vld [vmem:[#allocation7 + $0x14] sm:$0xf]
    %v101 = vld [vmem:[#allocation7 + $0x18] sm:$0xf]
    %v102 = vld [vmem:[#allocation7 + $0x1c] sm:$0xf]
    %v103 = vld [vmem:[#allocation7 + $0x20] sm:$0xf]
    %v104 = vld [vmem:[#allocation7 + $0x24] sm:$0xf]
    %v105 = vld [vmem:[#allocation7 + $0x28] sm:$0xf]
    %v106 = vld [vmem:[#allocation7 + $0x2c] sm:$0xf]
    %v107 = vld [vmem:[#allocation7 + $0x30] sm:$0xf]
    %v108 = vld [vmem:[#allocation7 + $0x34] sm:$0xf]
    %v109 = vld [vmem:[#allocation7 + $0x38] sm:$0xf]
    %v110 = vld [vmem:[#allocation7 + $0x3c] sm:$0xf]
    %v127 = vunpack.c.l.b16 %v79
    %v128 = vunpack.c.l.b16 %v80
    %v129 = vunpack.c.l.b16 %v81
    %v130 = vunpack.c.l.b16 %v82
    %v131 = vunpack.c.l.b16 %v83
    %v132 = vunpack.c.l.b16 %v84
    %v133 = vunpack.c.l.b16 %v85
    %v134 = vunpack.c.l.b16 %v86
    %v135 = vunpack.c.l.b16 %v87
    %v136 = vunpack.c.l.b16 %v88
    %v137 = vunpack.c.l.b16 %v89
    %v138 = vunpack.c.l.b16 %v90
    %v139 = vunpack.c.l.b16 %v91
    %v140 = vunpack.c.l.b16 %v92
    %v141 = vunpack.c.l.b16 %v93
    %v142 = vunpack.c.l.b16 %v94
    %v143 = vpack.c.b16 %v128, %v127
    %v144 = vpack.c.b16 %v130, %v129
    %v145 = vpack.c.b16 %v132, %v131
    %v146 = vpack.c.b16 %v134, %v133
    %v147 = vpack.c.b16 %v136, %v135
    %v148 = vpack.c.b16 %v138, %v137
    %v149 = vpack.c.b16 %v140, %v139
    %v150 = vpack.c.b16 %v142, %v141
    %v175 = vunpack.c.l.b16 %v95
    %v176 = vunpack.c.l.b16 %v96
    %v177 = vunpack.c.l.b16 %v97
    %v178 = vunpack.c.l.b16 %v98
    %v179 = vunpack.c.l.b16 %v99
    %v180 = vunpack.c.l.b16 %v100
    %v181 = vunpack.c.l.b16 %v101
    %v182 = vunpack.c.l.b16 %v102
    %v183 = vunpack.c.l.b16 %v103
    %v184 = vunpack.c.l.b16 %v104
    %v185 = vunpack.c.l.b16 %v105
    %v186 = vunpack.c.l.b16 %v106
    %v187 = vunpack.c.l.b16 %v107
    %v188 = vunpack.c.l.b16 %v108
    %v189 = vunpack.c.l.b16 %v109
    %v190 = vunpack.c.l.b16 %v110
    %v191 = vpack.c.b16 %v176, %v175
    %v192 = vpack.c.b16 %v178, %v177
    %v193 = vpack.c.b16 %v180, %v179
    %v194 = vpack.c.b16 %v182, %v181
    %v195 = vpack.c.b16 %v184, %v183
    %v196 = vpack.c.b16 %v186, %v185
    %v197 = vpack.c.b16 %v188, %v187
    %v198 = vpack.c.b16 %v190, %v189
    %207 = vmatprep.subr.bf16.mxu0 0
    %208 = vmatpush1.bf16.msra.mxu0 %v191
    %209 = vmatprep.subr.bf16.mxu0 0
    %210 = vmatpush1.bf16.msra.mxu0 %v192
    %211 = vmatprep.subr.bf16.mxu0 0
    %212 = vmatpush1.bf16.msra.mxu0 %v193
    %213 = vmatprep.subr.bf16.mxu0 0
    %214 = vmatpush1.bf16.msra.mxu0 %v194
    %215 = vmatprep.subr.bf16.mxu0 0
    %216 = vmatpush1.bf16.msra.mxu0 %v195
    %217 = vmatprep.subr.bf16.mxu0 0
    %218 = vmatpush1.bf16.msra.mxu0 %v196
    %219 = vmatprep.subr.bf16.mxu0 0
    %220 = vmatpush1.bf16.msra.mxu0 %v197
    %221 = vmatprep.subr.bf16.mxu0 0
    %222 = vmatpush1.bf16.msra.mxu0 %v198
    %223 = vmatprep.subr.bf16.mxu0 0
    %224 = vmatpush1.bf16.msra.mxu0 0
    %225 = vmatprep.subr.bf16.mxu0 0
    %226 = vmatpush1.bf16.msra.mxu0 0
    %227 = vmatprep.subr.bf16.mxu0 0
    %228 = vmatpush1.bf16.msra.mxu0 0
    %229 = vmatprep.subr.bf16.mxu0 0
    %230 = vmatpush1.bf16.msra.mxu0 0
    %231 = vmatprep.subr.bf16.mxu0 0
    %232 = vmatpush1.bf16.msra.mxu0 0
    %233 = vmatprep.subr.bf16.mxu0 0
    %234 = vmatpush1.bf16.msra.mxu0 0
    %235 = vmatprep.subr.bf16.mxu0 0
    %236 = vmatpush1.bf16.msra.mxu0 0
    %237 = vmatprep.subr.bf16.mxu0 0
    %238 = vmatpush1.bf16.msra.mxu0 0
    %239 = vmatprep.mubr.bf16.mxu0 0
    %240 = vmatmul.mubr.bf16.gmra.mrb[0].mxu0 %v143
    %v241 = vpop.f32.mrb[0].mxu0
    %v242 = vadd.f32 0.0, %v241
    %v243 = vpop.f32.mrb[0].mxu0
    %v244 = vpop.f32.mrb[0].mxu0
    %v245 = vadd.f32 0.0, %v244
    %v246 = vpop.f32.mrb[0].mxu0
    %247 = vmatprep.mubr.bf16.mxu0 0
    %248 = vmatmul.mubr.bf16.gmra.mrb[0].mxu0 %v144
    %v249 = vpop.f32.mrb[0].mxu0
    %v250 = vadd.f32 0.0, %v249
    %v251 = vpop.f32.mrb[0].mxu0
    %v252 = vpop.f32.mrb[0].mxu0
    %v253 = vadd.f32 0.0, %v252
    %v254 = vpop.f32.mrb[0].mxu0
    %255 = vmatprep.mubr.bf16.mxu0 0
    %256 = vmatmul.mubr.bf16.gmra.mrb[0].mxu0 %v145
    %v257 = vpop.f32.mrb[0].mxu0
    %v258 = vadd.f32 0.0, %v257
    %v259 = vpop.f32.mrb[0].mxu0
    %v260 = vpop.f32.mrb[0].mxu0
    %v261 = vadd.f32 0.0, %v260
    %v262 = vpop.f32.mrb[0].mxu0
    %263 = vmatprep.mubr.bf16.mxu0 0
    %264 = vmatmul.mubr.bf16.gmra.mrb[0].mxu0 %v146
    %v265 = vpop.f32.mrb[0].mxu0
    %v266 = vadd.f32 0.0, %v265
    %v267 = vpop.f32.mrb[0].mxu0
    %v268 = vpop.f32.mrb[0].mxu0
    %v269 = vadd.f32 0.0, %v268
    %v270 = vpop.f32.mrb[0].mxu0
    %271 = vmatprep.mubr.bf16.mxu0 0
    %272 = vmatmul.mubr.bf16.gmra.mrb[0].mxu0 %v147
    %v273 = vpop.f32.mrb[0].mxu0
    %v274 = vadd.f32 0.0, %v273
    %v275 = vpop.f32.mrb[0].mxu0
    %v276 = vpop.f32.mrb[0].mxu0
    %v277 = vadd.f32 0.0, %v276
    %v278 = vpop.f32.mrb[0].mxu0
    %279 = vmatprep.mubr.bf16.mxu0 0
    %280 = vmatmul.mubr.bf16.gmra.mrb[0].mxu0 %v148
    %v281 = vpop.f32.mrb[0].mxu0
    %v282 = vadd.f32 0.0, %v281
    %v283 = vpop.f32.mrb[0].mxu0
    %v284 = vpop.f32.mrb[0].mxu0
    %v285 = vadd.f32 0.0, %v284
    %v286 = vpop.f32.mrb[0].mxu0
    %287 = vmatprep.mubr.bf16.mxu0 0
    %288 = vmatmul.mubr.bf16.gmra.mrb[0].mxu0 %v149
    %v289 = vpop.f32.mrb[0].mxu0
    %v290 = vadd.f32 0.0, %v289
    %v291 = vpop.f32.mrb[0].mxu0
    %v292 = vpop.f32.mrb[0].mxu0
    %v293 = vadd.f32 0.0, %v292
    %v294 = vpop.f32.mrb[0].mxu0
    %295 = vmatprep.mubr.bf16.mxu0 0
    %296 = vmatmul.mubr.bf16.gmra.mrb[0].mxu0 %v150
    %v297 = vpop.f32.mrb[0].mxu0
    %v298 = vadd.f32 0.0, %v297
    %v299 = vpop.f32.mrb[0].mxu0
    %v300 = vpop.f32.mrb[0].mxu0
    %v301 = vadd.f32 0.0, %v300
    %v302 = vpop.f32.mrb[0].mxu0
    %303 = vdwg.mxu0
    %v304 = vld [vmem:[#allocation2] sm:$0xff]
    %v305 = vld [vmem:[#allocation2 + $0x8] sm:$0xff]
    %v306 = vld [vmem:[#allocation2 + $0x10] sm:$0xff]
    %v307 = vld [vmem:[#allocation2 + $0x18] sm:$0xff]
    %v308 = vld [vmem:[#allocation2 + $0x20] sm:$0xff]
    %v309 = vld [vmem:[#allocation2 + $0x28] sm:$0xff]
    %v310 = vld [vmem:[#allocation2 + $0x30] sm:$0xff]
    %v311 = vld [vmem:[#allocation2 + $0x38] sm:$0xff]
    %v312 = vld [vmem:[#allocation2 + $0x40] sm:$0xff]
    %v313 = vld [vmem:[#allocation2 + $0x48] sm:$0xff]
    %v314 = vld [vmem:[#allocation2 + $0x50] sm:$0xff]
    %v315 = vld [vmem:[#allocation2 + $0x58] sm:$0xff]
    %v316 = vld [vmem:[#allocation2 + $0x60] sm:$0xff]
    %v317 = vld [vmem:[#allocation2 + $0x68] sm:$0xff]
    %v318 = vld [vmem:[#allocation2 + $0x70] sm:$0xff]
    %v319 = vld [vmem:[#allocation2 + $0x78] sm:$0xff]
    %v320 = vld [vmem:[#allocation3] sm:$0xf]
    %v321 = vld [vmem:[#allocation3 + $0x4] sm:$0xf]
    %v322 = vld [vmem:[#allocation3 + $0x8] sm:$0xf]
    %v323 = vld [vmem:[#allocation3 + $0xc] sm:$0xf]
    %v324 = vld [vmem:[#allocation3 + $0x10] sm:$0xf]
    %v325 = vld [vmem:[#allocation3 + $0x14] sm:$0xf]
    %v326 = vld [vmem:[#allocation3 + $0x18] sm:$0xf]
    %v327 = vld [vmem:[#allocation3 + $0x1c] sm:$0xf]
    %v328 = vld [vmem:[#allocation3 + $0x20] sm:$0xf]
    %v329 = vld [vmem:[#allocation3 + $0x24] sm:$0xf]
    %v330 = vld [vmem:[#allocation3 + $0x28] sm:$0xf]
    %v331 = vld [vmem:[#allocation3 + $0x2c] sm:$0xf]
    %v332 = vld [vmem:[#allocation3 + $0x30] sm:$0xf]
    %v333 = vld [vmem:[#allocation3 + $0x34] sm:$0xf]
    %v334 = vld [vmem:[#allocation3 + $0x38] sm:$0xf]
    %v335 = vld [vmem:[#allocation3 + $0x3c] sm:$0xf]
    %v336 = vpack.c.bf16 %v245, %v242
    %v337 = vpack.c.bf16 %v253, %v250
    %v338 = vpack.c.bf16 %v261, %v258
    %v339 = vpack.c.bf16 %v269, %v266
    %v340 = vpack.c.bf16 %v277, %v274
    %v341 = vpack.c.bf16 %v285, %v282
    %v342 = vpack.c.bf16 %v293, %v290
    %v343 = vpack.c.bf16 %v301, %v298
    %v360 = vunpack.c.l.b16 %v320
    %v361 = vunpack.c.l.b16 %v321
    %v362 = vunpack.c.l.b16 %v322
    %v363 = vunpack.c.l.b16 %v323
    %v364 = vunpack.c.l.b16 %v324
    %v365 = vunpack.c.l.b16 %v325
    %v366 = vunpack.c.l.b16 %v326
    %v367 = vunpack.c.l.b16 %v327
    %v368 = vunpack.c.l.b16 %v328
    %v369 = vunpack.c.l.b16 %v329
    %v370 = vunpack.c.l.b16 %v330
    %v371 = vunpack.c.l.b16 %v331
    %v372 = vunpack.c.l.b16 %v332
    %v373 = vunpack.c.l.b16 %v333
    %v374 = vunpack.c.l.b16 %v334
    %v375 = vunpack.c.l.b16 %v335
    %v376 = vpack.c.b16 %v361, %v360
    %v377 = vpack.c.b16 %v363, %v362
    %v378 = vpack.c.b16 %v365, %v364
    %v379 = vpack.c.b16 %v367, %v366
    %v380 = vpack.c.b16 %v369, %v368
    %v381 = vpack.c.b16 %v371, %v370
    %v382 = vpack.c.b16 %v373, %v372
    %v383 = vpack.c.b16 %v375, %v374
    %392 = vmatprep.subr.bf16.mxu0 0
    %393 = vmatpush1.bf16.msra.mxu0 %v336
    %394 = vmatprep.subr.bf16.mxu0 0
    %395 = vmatpush1.bf16.msra.mxu0 %v337
    %396 = vmatprep.subr.bf16.mxu0 0
    %397 = vmatpush1.bf16.msra.mxu0 %v338
    %398 = vmatprep.subr.bf16.mxu0 0
    %399 = vmatpush1.bf16.msra.mxu0 %v339
    %400 = vmatprep.subr.bf16.mxu0 0
    %401 = vmatpush1.bf16.msra.mxu0 %v340
    %402 = vmatprep.subr.bf16.mxu0 0
    %403 = vmatpush1.bf16.msra.mxu0 %v341
    %404 = vmatprep.subr.bf16.mxu0 0
    %405 = vmatpush1.bf16.msra.mxu0 %v342
    %406 = vmatprep.subr.bf16.mxu0 0
    %407 = vmatpush1.bf16.msra.mxu0 %v343
    %408 = vmatprep.subr.bf16.mxu0 0
    %409 = vmatpush1.bf16.msra.mxu0 0
    %410 = vmatprep.subr.bf16.mxu0 0
    %411 = vmatpush1.bf16.msra.mxu0 0
    %412 = vmatprep.subr.bf16.mxu0 0
    %413 = vmatpush1.bf16.msra.mxu0 0
    %414 = vmatprep.subr.bf16.mxu0 0
    %415 = vmatpush1.bf16.msra.mxu0 0
    %416 = vmatprep.subr.bf16.mxu0 0
    %417 = vmatpush1.bf16.msra.mxu0 0
    %418 = vmatprep.subr.bf16.mxu0 0
    %419 = vmatpush1.bf16.msra.mxu0 0
    %420 = vmatprep.subr.bf16.mxu0 0
    %421 = vmatpush1.bf16.msra.mxu0 0
    %422 = vmatprep.subr.bf16.mxu0 0
    %423 = vmatpush1.bf16.msra.mxu0 0
    %424 = vmatprep.mubr.bf16.mxu0 0
    %425 = vmatmul.mubr.bf16.gmra.mrb[0].mxu0 %v376
    %v426 = vpop.f32.mrb[0].mxu0
    %v427 = vadd.f32 0.0, %v426
    %v428 = vpop.f32.mrb[0].mxu0
    %v429 = vpop.f32.mrb[0].mxu0
    %v430 = vadd.f32 0.0, %v429
    %v431 = vpop.f32.mrb[0].mxu0
    %432 = vmatprep.mubr.bf16.mxu0 0
    %433 = vmatmul.mubr.bf16.gmra.mrb[0].mxu0 %v377
    %v434 = vpop.f32.mrb[0].mxu0
    %v435 = vadd.f32 0.0, %v434
    %v436 = vpop.f32.mrb[0].mxu0
    %v437 = vpop.f32.mrb[0].mxu0
    %v438 = vadd.f32 0.0, %v437
    %v439 = vpop.f32.mrb[0].mxu0
    %440 = vmatprep.mubr.bf16.mxu0 0
    %441 = vmatmul.mubr.bf16.gmra.mrb[0].mxu0 %v378
    %v442 = vpop.f32.mrb[0].mxu0
    %v443 = vadd.f32 0.0, %v442
    %v444 = vpop.f32.mrb[0].mxu0
    %v445 = vpop.f32.mrb[0].mxu0
    %v446 = vadd.f32 0.0, %v445
    %v447 = vpop.f32.mrb[0].mxu0
    %448 = vmatprep.mubr.bf16.mxu0 0
    %449 = vmatmul.mubr.bf16.gmra.mrb[0].mxu0 %v379
    %v450 = vpop.f32.mrb[0].mxu0
    %v451 = vadd.f32 0.0, %v450
    %v452 = vpop.f32.mrb[0].mxu0
    %v453 = vpop.f32.mrb[0].mxu0
    %v454 = vadd.f32 0.0, %v453
    %v455 = vpop.f32.mrb[0].mxu0
    %456 = vmatprep.mubr.bf16.mxu0 0
    %457 = vmatmul.mubr.bf16.gmra.mrb[0].mxu0 %v380
    %v458 = vpop.f32.mrb[0].mxu0
    %v459 = vadd.f32 0.0, %v458
    %v460 = vpop.f32.mrb[0].mxu0
    %v461 = vpop.f32.mrb[0].mxu0
    %v462 = vadd.f32 0.0, %v461
    %v463 = vpop.f32.mrb[0].mxu0
    %464 = vmatprep.mubr.bf16.mxu0 0
    %465 = vmatmul.mubr.bf16.gmra.mrb[0].mxu0 %v381
    %v466 = vpop.f32.mrb[0].mxu0
    %v467 = vadd.f32 0.0, %v466
    %v468 = vpop.f32.mrb[0].mxu0
    %v469 = vpop.f32.mrb[0].mxu0
    %v470 = vadd.f32 0.0, %v469
    %v471 = vpop.f32.mrb[0].mxu0
    %472 = vmatprep.mubr.bf16.mxu0 0
    %473 = vmatmul.mubr.bf16.gmra.mrb[0].mxu0 %v382
    %v474 = vpop.f32.mrb[0].mxu0
    %v475 = vadd.f32 0.0, %v474
    %v476 = vpop.f32.mrb[0].mxu0
    %v477 = vpop.f32.mrb[0].mxu0
    %v478 = vadd.f32 0.0, %v477
    %v479 = vpop.f32.mrb[0].mxu0
    %480 = vmatprep.mubr.bf16.mxu0 0
    %481 = vmatmul.mubr.bf16.gmra.mrb[0].mxu0 %v383
    %v482 = vpop.f32.mrb[0].mxu0
    %v483 = vadd.f32 0.0, %v482
    %v484 = vpop.f32.mrb[0].mxu0
    %v485 = vpop.f32.mrb[0].mxu0
    %v486 = vadd.f32 0.0, %v485
    %v487 = vpop.f32.mrb[0].mxu0
    %488 = vdwg.mxu0
    %v489 = vadd.f32 %v304, %v427
    %v490 = vadd.f32 %v305, %v430
    %v491 = vadd.f32 %v306, %v435
    %v492 = vadd.f32 %v307, %v438
    %v493 = vadd.f32 %v308, %v443
    %v494 = vadd.f32 %v309, %v446
    %v495 = vadd.f32 %v310, %v451
    %v496 = vadd.f32 %v311, %v454
    %v497 = vadd.f32 %v312, %v459
    %v498 = vadd.f32 %v313, %v462
    %v499 = vadd.f32 %v314, %v467
    %v500 = vadd.f32 %v315, %v470
    %v501 = vadd.f32 %v316, %v475
    %v502 = vadd.f32 %v317, %v478
    %v503 = vadd.f32 %v318, %v483
    %v504 = vadd.f32 %v319, %v486
    %505 = vst [vmem:[#allocation2] sm:$0xff] %v489
    %506 = vst [vmem:[#allocation2 + $0x8] sm:$0xff] %v490
    %507 = vst [vmem:[#allocation2 + $0x10] sm:$0xff] %v491
    %508 = vst [vmem:[#allocation2 + $0x18] sm:$0xff] %v492
    %509 = vst [vmem:[#allocation2 + $0x20] sm:$0xff] %v493
    %510 = vst [vmem:[#allocation2 + $0x28] sm:$0xff] %v494
    %511 = vst [vmem:[#allocation2 + $0x30] sm:$0xff] %v495
    %512 = vst [vmem:[#allocation2 + $0x38] sm:$0xff] %v496
    %513 = vst [vmem:[#allocation2 + $0x40] sm:$0xff] %v497
    %514 = vst [vmem:[#allocation2 + $0x48] sm:$0xff] %v498
    %515 = vst [vmem:[#allocation2 + $0x50] sm:$0xff] %v499
    %516 = vst [vmem:[#allocation2 + $0x58] sm:$0xff] %v500
    %517 = vst [vmem:[#allocation2 + $0x60] sm:$0xff] %v501
    %518 = vst [vmem:[#allocation2 + $0x68] sm:$0xff] %v502
    %519 = vst [vmem:[#allocation2 + $0x70] sm:$0xff] %v503
    %520 = vst [vmem:[#allocation2 + $0x78] sm:$0xff] %v504
    // Predicated region
    $region34: #{traditional_gcn_forward.2} parent=1 // pred_check
      %p521 = pneg %p59
    $region35: #{traditional_gcn_forward.2} parent=1 // pred_check_branch
      %523 = sbr.rel (%p521) target = $region37
    $region36: #{traditional_gcn_forward.2} parent=1 // pred_region
      %v524 = vld [vmem:[#allocation2] sm:$0xff]
      %v525 = vld [vmem:[#allocation2 + $0x8] sm:$0xff]
      %v526 = vld [vmem:[#allocation2 + $0x10] sm:$0xff]
      %v527 = vld [vmem:[#allocation2 + $0x18] sm:$0xff]
      %v528 = vld [vmem:[#allocation2 + $0x20] sm:$0xff]
      %v529 = vld [vmem:[#allocation2 + $0x28] sm:$0xff]
      %v530 = vld [vmem:[#allocation2 + $0x30] sm:$0xff]
      %v531 = vld [vmem:[#allocation2 + $0x38] sm:$0xff]
      %v532 = vld [vmem:[#allocation2 + $0x40] sm:$0xff]
      %v533 = vld [vmem:[#allocation2 + $0x48] sm:$0xff]
      %v534 = vld [vmem:[#allocation2 + $0x50] sm:$0xff]
      %v535 = vld [vmem:[#allocation2 + $0x58] sm:$0xff]
      %v536 = vld [vmem:[#allocation2 + $0x60] sm:$0xff]
      %v537 = vld [vmem:[#allocation2 + $0x68] sm:$0xff]
      %v538 = vld [vmem:[#allocation2 + $0x70] sm:$0xff]
      %v539 = vld [vmem:[#allocation2 + $0x78] sm:$0xff]
      %v540 = vld [vmem:[%s3] sm:$0x1]
      %v542 = vlaneseq
      %v543 = vshrl.u32 %v542, 7
      %v544 = vsub.s32 0, %v543
      %v545 = vrot.slane %v540, %v544
      %v547 = vadd.f32 %v524, %v545
      %v548 = vadd.f32 %v525, %v545
      %v549 = vadd.f32 %v526, %v545
      %v550 = vadd.f32 %v527, %v545
      %v551 = vadd.f32 %v528, %v545
      %v552 = vadd.f32 %v529, %v545
      %v553 = vadd.f32 %v530, %v545
      %v554 = vadd.f32 %v531, %v545
      %v555 = vadd.f32 %v532, %v545
      %v556 = vadd.f32 %v533, %v545
      %v557 = vadd.f32 %v534, %v545
      %v558 = vadd.f32 %v535, %v545
      %v559 = vadd.f32 %v536, %v545
      %v560 = vadd.f32 %v537, %v545
      %v561 = vadd.f32 %v538, %v545
      %v562 = vadd.f32 %v539, %v545
      %v563 = vmax.f32 %v547, 0.0
      %v564 = vmax.f32 %v548, 0.0
      %v565 = vmax.f32 %v549, 0.0
      %v566 = vmax.f32 %v550, 0.0
      %v567 = vmax.f32 %v551, 0.0
      %v568 = vmax.f32 %v552, 0.0
      %v569 = vmax.f32 %v553, 0.0
      %v570 = vmax.f32 %v554, 0.0
      %v571 = vmax.f32 %v555, 0.0
      %v572 = vmax.f32 %v556, 0.0
      %v573 = vmax.f32 %v557, 0.0
      %v574 = vmax.f32 %v558, 0.0
      %v575 = vmax.f32 %v559, 0.0
      %v576 = vmax.f32 %v560, 0.0
      %v577 = vmax.f32 %v561, 0.0
      %v578 = vmax.f32 %v562, 0.0
      %v579 = vpack.c.bf16 %v564, %v563
      %v580 = vpack.c.bf16 %v566, %v565
      %v581 = vpack.c.bf16 %v568, %v567
      %v582 = vpack.c.bf16 %v570, %v569
      %v583 = vpack.c.bf16 %v572, %v571
      %v584 = vpack.c.bf16 %v574, %v573
      %v585 = vpack.c.bf16 %v576, %v575
      %v586 = vpack.c.bf16 %v578, %v577
      %v595 = vunpack.c.l.b16 %v579
      %v596 = vunpack.c.h.b16 %v579
      %v597 = vunpack.c.l.b16 %v580
      %v598 = vunpack.c.h.b16 %v580
      %v599 = vunpack.c.l.b16 %v581
      %v600 = vunpack.c.h.b16 %v581
      %v601 = vunpack.c.l.b16 %v582
      %v602 = vunpack.c.h.b16 %v582
      %v603 = vunpack.c.l.b16 %v583
      %v604 = vunpack.c.h.b16 %v583
      %v605 = vunpack.c.l.b16 %v584
      %v606 = vunpack.c.h.b16 %v584
      %v607 = vunpack.c.l.b16 %v585
      %v608 = vunpack.c.h.b16 %v585
      %v609 = vunpack.c.l.b16 %v586
      %v610 = vunpack.c.h.b16 %v586
      %v611 = vpack.c.b16 %v595, %v595
      %v612 = vpack.c.b16 %v596, %v596
      %v613 = vpack.c.b16 %v597, %v597
      %v614 = vpack.c.b16 %v598, %v598
      %v615 = vpack.c.b16 %v599, %v599
      %v616 = vpack.c.b16 %v600, %v600
      %v617 = vpack.c.b16 %v601, %v601
      %v618 = vpack.c.b16 %v602, %v602
      %v619 = vpack.c.b16 %v603, %v603
      %v620 = vpack.c.b16 %v604, %v604
      %v621 = vpack.c.b16 %v605, %v605
      %v622 = vpack.c.b16 %v606, %v606
      %v623 = vpack.c.b16 %v607, %v607
      %v624 = vpack.c.b16 %v608, %v608
      %v625 = vpack.c.b16 %v609, %v609
      %v626 = vpack.c.b16 %v610, %v610
      %643 = vst [vmem:[%s4] sm:$0xf] %v611
      %644 = vst [vmem:[%s4 + $0x4] sm:$0xf] %v612
      %645 = vst [vmem:[%s4 + $0x8] sm:$0xf] %v613
      %646 = vst [vmem:[%s4 + $0xc] sm:$0xf] %v614
      %647 = vst [vmem:[%s4 + $0x10] sm:$0xf] %v615
      %648 = vst [vmem:[%s4 + $0x14] sm:$0xf] %v616
      %649 = vst [vmem:[%s4 + $0x18] sm:$0xf] %v617
      %650 = vst [vmem:[%s4 + $0x1c] sm:$0xf] %v618
      %651 = vst [vmem:[%s4 + $0x20] sm:$0xf] %v619
      %652 = vst [vmem:[%s4 + $0x24] sm:$0xf] %v620
      %653 = vst [vmem:[%s4 + $0x28] sm:$0xf] %v621
      %654 = vst [vmem:[%s4 + $0x2c] sm:$0xf] %v622
      %655 = vst [vmem:[%s4 + $0x30] sm:$0xf] %v623
      %656 = vst [vmem:[%s4 + $0x34] sm:$0xf] %v624
      %657 = vst [vmem:[%s4 + $0x38] sm:$0xf] %v625
      %658 = vst [vmem:[%s4 + $0x3c] sm:$0xf] %v626
    $region37: #{traditional_gcn_forward.2} parent=1 // pred_fallthru
      _
    // Predicated region
    $region38: #{traditional_gcn_forward.2} parent=1 // pred_check
      _
    $region39: #{traditional_gcn_forward.2} parent=1 // pred_check_branch
      %660 = sbr.rel (0) target = $region41
    $region40: #{traditional_gcn_forward.2} parent=1 // pred_region
      _
    $region41: #{traditional_gcn_forward.2} parent=1 // pred_fallthru
      _
    // Predicated region
    $region42: #{traditional_gcn_forward.2} parent=1 // pred_check
      _
    $region43: #{traditional_gcn_forward.2} parent=1 // pred_check_branch
      %662 = sbr.rel (0) target = $region45
    $region44: #{traditional_gcn_forward.2} parent=1 // pred_region
      _
    $region45: #{traditional_gcn_forward.2} parent=1 // pred_fallthru
      _
    %663 = vsyncpa [#allocation4], 1
    %664 = vsyncpa [#allocation6], 1

</llo_original>
